<compile_context>
chip_gen: v6e
topology: v6e:2x2x1
jax: 0.10.0
libtpu: 0.0.40
codegen_flags: <defaults>
</compile_context>

<pallas_src>
import functools

import jax
import jax.numpy as jnp
from jax.experimental import pallas as pl
from jax.experimental.pallas import tpu as pltpu


def pgn_kernel(x_ref, w1_ref, w2_ref, o_ref, *, out_dim):
    # hidden = relu(x @ W1^T); cast x to bf16 in-vreg, f32 MXU accumulation.
    x_bf = x_ref[...].astype(jnp.bfloat16)
    h = jnp.dot(x_bf, w1_ref[...], preferred_element_type=jnp.float32)
    h = jnp.maximum(h, 0.0)
    # Dropout(p=0.0) is the identity -> no-op.

    # logits = hidden @ W2^T; w2_ref holds W2^T zero-padded to [n_dim, 128]
    # so the second matmul result tile is lane-dense.
    logits = jnp.dot(
        h.astype(jnp.bfloat16), w2_ref[...], preferred_element_type=jnp.float32
    )

    # Mask the zero-padded logit lanes so they do not perturb the softmax.
    col = jax.lax.broadcasted_iota(jnp.int32, logits.shape, dimension=1)
    logits = jnp.where(col < out_dim, logits, -1e30)

    # Numerically-stable softmax over the last dim, all in f32 (v5e has no
    # bf16 VPU/EUP path).  Exact reciprocal: rows must sum to 1 for sampling.
    m = jnp.max(logits, axis=-1, keepdims=True)
    e = jnp.exp(logits - m)
    denom = jnp.sum(e, axis=-1, keepdims=True)
    probs = e * pl.reciprocal(denom, approx=False)

    # Narrow store: only the real action_space lanes (masked vst on the lane
    # tile, but 16x fewer HBM writeback bytes than a padded f32 slab).
    o_ref[...] = probs[:, :out_dim].astype(o_ref.dtype)


def prepare_pgn_weights(w1, w2, *, lane_pad=128):
    """One-time weight prep (do NOT call per forward).

    w1: [n_dim, state_space] (PyTorch nn.Linear layout, out x in)
    w2: [action_space, n_dim]
    Returns (w1_t_bf16 [state_space, n_dim], w2_t_padded_bf16 [n_dim, n_pad]).
    """
    n_dim = w1.shape[0]
    out_dim = w2.shape[0]
    n_pad = max(lane_pad, pl.cdiv(out_dim, lane_pad) * lane_pad)
    w1_bf = w1.T.astype(jnp.bfloat16)                      # [in_dim, n_dim]
    w2_bf = jnp.zeros((n_dim, n_pad), jnp.bfloat16)
    w2_bf = w2_bf.at[:, :out_dim].set(w2.T.astype(jnp.bfloat16))
    return w1_bf, w2_bf


def pgn_forward(x, w1_bf, w2_bf, out_dim, *, tm=1024):
    """x: [B, in_dim] f32; w1_bf: [in_dim, n_dim] bf16; w2_bf: [n_dim, n_pad] bf16."""
    B, in_dim = x.shape
    n_dim, n_pad = w2_bf.shape

    # Batch tile: big enough to amortize per-grid-step overhead (~0.35 us),
    # capped at tm so large batches keep >=2 grid steps (v7x: 2 TensorCores)
    # and VMEM stays small.  Must be a multiple of 8 (sublane).
    tm_eff = min(tm, pl.cdiv(B, 8) * 8)
    grid = (pl.cdiv(B, tm_eff),)   # ragged last block handled by Pallas

    kernel = functools.partial(pgn_kernel, out_dim=out_dim)

    return pl.pallas_call(
        kernel,
        out_shape=jax.ShapeDtypeStruct((B, out_dim), jnp.float32),
        grid_spec=pl.GridSpec(
            grid=grid,
            in_specs=[
                pl.BlockSpec((tm_eff, in_dim), lambda i: (i, 0)),
                # Weights: full blocks, VMEM-resident across all grid steps.
                pl.BlockSpec((in_dim, n_dim), lambda i: (0, 0)),
                pl.BlockSpec((n_dim, n_pad), lambda i: (0, 0)),
            ],
            # Narrow output block: last dim == full array dim -> legal.
            out_specs=pl.BlockSpec((tm_eff, out_dim), lambda i: (i, 0)),
        ),
        compiler_params=pltpu.CompilerParams(
            dimension_semantics=("parallel",)
        ),
    )(x, w1_bf, w2_bf)


def pgn_reference(x, w1, w2):
    # f32 reference in PyTorch layout: y = softmax(relu(x @ W1^T) @ W2^T).
    h = jnp.maximum(x @ w1.T, 0.0)
    logits = h @ w2.T
    return jax.nn.softmax(logits, axis=-1)


if __name__ == "__main__":
    # Small shapes consistent with the module: state_space=32, n_dim=128,
    # action_space=8.
    state_space, n_dim, action_space = 32, 128, 8

    key = jax.random.PRNGKey(0)
    kx, k1, k2, kx2 = jax.random.split(key, 4)

    # nn.Linear weights are [out, in]; deterministic init.
    w1 = jax.random.normal(k1, (n_dim, state_space), dtype=jnp.float32) * 0.1
    w2 = jax.random.normal(k2, (action_space, n_dim), dtype=jnp.float32) * 0.1

    # One-time weight preparation (hoisted out of the forward path).
    w1_bf, w2_bf = prepare_pgn_weights(w1, w2)

    # Case 1: B=8 (tile-aligned, single grid step).
    x = jax.random.normal(kx, (8, state_space), dtype=jnp.float32)
    out = pgn_forward(x, w1_bf, w2_bf, action_space)
    jax.block_until_ready(out)
    ref = pgn_reference(x, w1, w2)
    assert out.shape == (8, action_space)
    # bf16 matmuls => relaxed tolerances vs f32 reference.
    assert jnp.allclose(out, ref, atol=3e-2, rtol=3e-2)
    assert jnp.allclose(jnp.sum(out, axis=-1), 1.0, atol=1e-3)

    # Case 2: B=20 (ragged last block, no wrapper-side padding pass).
    x2 = jax.random.normal(kx2, (20, state_space), dtype=jnp.float32)
    out2 = pgn_forward(x2, w1_bf, w2_bf, action_space)
    jax.block_until_ready(out2)
    ref2 = pgn_reference(x2, w1, w2)
    assert out2.shape == (20, action_space)
    assert jnp.allclose(out2, ref2, atol=3e-2, rtol=3e-2)
    assert jnp.allclose(jnp.sum(out2, axis=-1), 1.0, atol=1e-3)

    print("KERNEL_OK")
</pallas_src>

<mosaic_0001>
module attributes {stable_mosaic.version = 11 : i64} {
  func.func @pgn_kernel(%arg0: i32, %arg1: memref<8x32xf32, #tpu.memory_space<vmem>>, %arg2: memref<32x128xbf16, #tpu.memory_space<vmem>>, %arg3: memref<128x128xbf16, #tpu.memory_space<vmem>>, %arg4: memref<8x8xf32, #tpu.memory_space<vmem>>) attributes {dimension_semantics = [#tpu.dimension_semantics<parallel>], iteration_bounds = array<i64: 1>, scalar_prefetch = 0 : i64, scratch_operands = 0 : i64, tpu.core_type = #tpu.core_type<tc>, window_params = [{transform_indices = @transform_0, window_bounds = array<i64: 8, 32>}, {pipeline_mode = #tpu.pipeline_mode<synchronous>, transform_indices = @transform_1, window_bounds = array<i64: 32, 128>}, {pipeline_mode = #tpu.pipeline_mode<synchronous>, transform_indices = @transform_2, window_bounds = array<i64: 128, 128>}, {transform_indices = @transform_3, window_bounds = array<i64: 8, 8>}]} {
    %c0 = arith.constant 0 : index
    %c0_0 = arith.constant 0 : index
    %0 = vector.load %arg1[%c0, %c0_0] : memref<8x32xf32, #tpu.memory_space<vmem>>, vector<8x32xf32>
    %1 = arith.truncf %0 : vector<8x32xf32> to vector<8x32xbf16>
    %c0_1 = arith.constant 0 : index
    %c0_2 = arith.constant 0 : index
    %2 = vector.load %arg2[%c0_1, %c0_2] : memref<32x128xbf16, #tpu.memory_space<vmem>>, vector<32x128xbf16>
    %cst = arith.constant dense<0.000000e+00> : vector<8x128xf32>
    %3 = tpu.matmul %1, %2, %cst {dimension_numbers = #tpu.dot_dimension_numbers<[1], [0], [0], [1], [0, 0, 1, 1], [], []>} : vector<8x32xbf16>, vector<32x128xbf16>, vector<8x128xf32> -> vector<8x128xf32>
    %cst_3 = arith.constant 0.000000e+00 : f32
    %4 = vector.broadcast %cst_3 : f32 to vector<8x128xf32>
    %5 = arith.maximumf %3, %4 : vector<8x128xf32>
    %6 = arith.truncf %5 : vector<8x128xf32> to vector<8x128xbf16>
    %c0_4 = arith.constant 0 : index
    %c0_5 = arith.constant 0 : index
    %7 = vector.load %arg3[%c0_4, %c0_5] : memref<128x128xbf16, #tpu.memory_space<vmem>>, vector<128x128xbf16>
    %cst_6 = arith.constant dense<0.000000e+00> : vector<8x128xf32>
    %8 = tpu.matmul %6, %7, %cst_6 {dimension_numbers = #tpu.dot_dimension_numbers<[1], [0], [0], [1], [0, 0, 1, 1], [], []>} : vector<8x128xbf16>, vector<128x128xbf16>, vector<8x128xf32> -> vector<8x128xf32>
    %9 = tpu.iota {dimensions = array<i32: 1>} : vector<8x128xi32>
    %c8_i32 = arith.constant 8 : i32
    %10 = vector.broadcast %c8_i32 : i32 to vector<8x128xi32>
    %11 = arith.cmpi slt, %9, %10 : vector<8x128xi32>
    %cst_7 = arith.constant -1.000000e+30 : f32
    %12 = vector.broadcast %cst_7 : f32 to vector<8x128xf32>
    %13 = arith.select %11, %8, %12 : vector<8x128xi1>, vector<8x128xf32>
    %cst_8 = arith.constant dense<0xFF800000> : vector<8xf32>
    %14 = vector.multi_reduction <maximumf>, %13, %cst_8 [1] : vector<8x128xf32> to vector<8xf32>
    %15 = vector.shape_cast %14 : vector<8xf32> to vector<8x1xf32>
    %16 = vector.broadcast %15 : vector<8x1xf32> to vector<8x128xf32>
    %17 = arith.subf %13, %16 : vector<8x128xf32>
    %18 = math.exp %17 : vector<8x128xf32>
    %cst_9 = arith.constant dense<0.000000e+00> : vector<8xf32>
    %19 = vector.multi_reduction <add>, %18, %cst_9 [1] : vector<8x128xf32> to vector<8xf32>
    %20 = vector.shape_cast %19 : vector<8xf32> to vector<8x1xf32>
    %21 = tpu.reciprocal %20 : vector<8x1xf32> -> vector<8x1xf32>
    %22 = vector.broadcast %21 : vector<8x1xf32> to vector<8x128xf32>
    %23 = arith.mulf %18, %22 : vector<8x128xf32>
    %24 = vector.extract_strided_slice %23 {offsets = [0, 0], sizes = [8, 8], strides = [1, 1]} : vector<8x128xf32> to vector<8x8xf32>
    %c0_10 = arith.constant 0 : index
    %c0_11 = arith.constant 0 : index
    %25 = vector.load %arg4[%c0_10, %c0_11] : memref<8x8xf32, #tpu.memory_space<vmem>>, vector<8x8xf32>
    tpu.vector_store %arg4[%c0_10, %c0_11], %24 {strides = array<i32>} : memref<8x8xf32, #tpu.memory_space<vmem>>, vector<8x8xf32>,
    return
  }
  func.func @transform_0(%arg0: i32) -> (i32, i32) {
    %c0_i32 = arith.constant 0 : i32
    %c0_i32_0 = arith.constant 0 : i32
    return %arg0, %c0_i32 : i32, i32
  }
  func.func @transform_1(%arg0: i32) -> (i32, i32) {
    %c0_i32 = arith.constant 0 : i32
    %c0_i32_0 = arith.constant 0 : i32
    %c0_i32_1 = arith.constant 0 : i32
    return %c0_i32, %c0_i32_0 : i32, i32
  }
  func.func @transform_2(%arg0: i32) -> (i32, i32) {
    %c0_i32 = arith.constant 0 : i32
    %c0_i32_0 = arith.constant 0 : i32
    %c0_i32_1 = arith.constant 0 : i32
    return %c0_i32, %c0_i32_0 : i32, i32
  }
  func.func @transform_3(%arg0: i32) -> (i32, i32) {
    %c0_i32 = arith.constant 0 : i32
    %c0_i32_0 = arith.constant 0 : i32
    return %arg0, %c0_i32 : i32, i32
  }
}

</mosaic_0001>

<llo_original>
// kernel: tpu_custom_call.1
$region0: #{tpu_custom_call.1}
  #allocation0 [shape = 'u32[]', space=smem, size = 0x4, offset = 0x4, fixed_abs, tag = 'smem constant byte address 0x4 - core index']
  #allocation1 [shape = 'u32[144,128]{1,0:T(1,128)}', space=vmem, size = 0x12000, scoped, tag = 'internal scratch']
  %s0 = inlined_call_operand.hbm [shape: f32[8,32], index: 0, kind: input, shape index: {}]
  %s1 = inlined_call_operand.hbm [shape: bf16[32,128], index: 1, kind: input, shape index: {}]
  %s2 = inlined_call_operand.hbm [shape: bf16[128,128], index: 2, kind: input, shape index: {}]
  %s3 = inlined_call_operand.hbm [shape: f32[8,8], index: 3, kind: output, shape index: {}]
  %s4 = sld [smem:[#allocation0]]
  $region34: #{tpu_custom_call.1} parent=0
    _
  %s6 = ssub.s32 1, %s4
  %s7 = scalar_select 0, %s6, %s4
  $region1: #{tpu_custom_call.1} parent=0
    #allocation2 [shape = 'u8[4096]{0}', space=vmem, size = 0x1000, scoped, tag = 'input window, operand 0, single buffered']
    #allocation3 [shape = 's32[1]{0}', space=sflag, size = 0x4, scoped, tag = 'scoped memory for tpu_custom_call.1']
    #allocation4 [shape = 's32[1]{0}', space=sflag, size = 0x4, scoped, tag = 'scoped memory for tpu_custom_call.1']
    #allocation5 [shape = 'u8[8192]{0}', space=vmem, size = 0x2000, scoped, tag = 'input window, operand 1, single buffered']
    #allocation6 [shape = 's32[1]{0}', space=sflag, size = 0x4, scoped, tag = 'scoped memory for tpu_custom_call.1']
    #allocation7 [shape = 'u8[32768]{0}', space=vmem, size = 0x8000, scoped, tag = 'input window, operand 2, single buffered']
    #allocation8 [shape = 'u8[4096]{0}', space=vmem, size = 0x1000, scoped, tag = 'output window, operand 0, single buffered']
    %8 = vsyncpa [#allocation3], 0
    %9 = vsyncpa [#allocation6], 0
    %10 = vsyncpa [#allocation4], 0
    // Predicated region
    $region2: #{tpu_custom_call.1} parent=1 // pred_check
      _
    $region3: #{tpu_custom_call.1} parent=1 // pred_check_branch
      %12 = sbr.rel (0) target = $region5
    $region4: #{tpu_custom_call.1} parent=1 // pred_region
      %s14 = ssub.s32 128, 128
      %15 = vsyncadd [#allocation3], %s14
      %s17 = sshll.u32 [#allocation2], 4
      %s18 = int_to_ptr.vmem [resolvable:$true] %s17
      %20 = dma.hbm_to_vmem [thread:$0]  %s0, 128, %s18, [#allocation3]
    $region5: #{tpu_custom_call.1} parent=1 // pred_fallthru
      _
    // Predicated region
    $region6: #{tpu_custom_call.1} parent=1 // pred_check
      _
    $region7: #{tpu_custom_call.1} parent=1 // pred_check_branch
      %22 = sbr.rel (0) target = $region9
    $region8: #{tpu_custom_call.1} parent=1 // pred_region
      %s24 = ssub.s32 256, 256
      %25 = vsyncadd [#allocation6], %s24
      %s26 = sshll.u32 [#allocation5], 4
      %s27 = int_to_ptr.vmem [resolvable:$true] %s26
      %32 = dma.hbm_to_vmem [thread:$0]  %s1, 256, %s27, [#allocation6], 64, 64, 4
    $region9: #{tpu_custom_call.1} parent=1 // pred_fallthru
      _
    // Predicated region
    $region10: #{tpu_custom_call.1} parent=1 // pred_check
      _
    $region11: #{tpu_custom_call.1} parent=1 // pred_check_branch
      %34 = sbr.rel (0) target = $region13
    $region12: #{tpu_custom_call.1} parent=1 // pred_region
      %s36 = ssub.s32 1024, 1024
      %37 = vsyncadd [#allocation6], %s36
      %s38 = sshll.u32 [#allocation7], 4
      %s39 = int_to_ptr.vmem [resolvable:$true] %s38
      %44 = dma.hbm_to_vmem [thread:$0]  %s2, 1024, %s39, [#allocation6], 64, 64, 4
    $region13: #{tpu_custom_call.1} parent=1 // pred_fallthru
      _
    // Predicated region
    $region14: #{tpu_custom_call.1} parent=1 // pred_check
      _
    $region15: #{tpu_custom_call.1} parent=1 // pred_check_branch
      %46 = sbr.rel (0) target = $region17
    $region16: #{tpu_custom_call.1} parent=1 // pred_region
      %47 = dma.done [#allocation3], 128
    $region17: #{tpu_custom_call.1} parent=1 // pred_fallthru
      _
    // Predicated region
    $region18: #{tpu_custom_call.1} parent=1 // pred_check
      _
    $region19: #{tpu_custom_call.1} parent=1 // pred_check_branch
      %49 = sbr.rel (0) target = $region21
    $region20: #{tpu_custom_call.1} parent=1 // pred_region
      %50 = dma.done [#allocation6], 256
    $region21: #{tpu_custom_call.1} parent=1 // pred_fallthru
      _
    // Predicated region
    $region22: #{tpu_custom_call.1} parent=1 // pred_check
      _
    $region23: #{tpu_custom_call.1} parent=1 // pred_check_branch
      %52 = sbr.rel (0) target = $region25
    $region24: #{tpu_custom_call.1} parent=1 // pred_region
      %53 = dma.done [#allocation6], 1024
    $region25: #{tpu_custom_call.1} parent=1 // pred_fallthru
      _
    %v55 = vld [vmem:[#allocation2] sm:$0xff]
    %v56 = vpack.c.bf16 %v55, %v55
    %v57 = vld [vmem:[#allocation5] sm:$0xf]
    %v58 = vld [vmem:[#allocation5 + $0x4] sm:$0xf]
    %v59 = vld [vmem:[#allocation5 + $0x8] sm:$0xf]
    %v60 = vld [vmem:[#allocation5 + $0xc] sm:$0xf]
    %v65 = vunpack.c.l.b16 %v57
    %v66 = vunpack.c.l.b16 %v58
    %v67 = vunpack.c.l.b16 %v59
    %v68 = vunpack.c.l.b16 %v60
    %v69 = vpack.c.b16 %v66, %v65
    %v70 = vpack.c.b16 %v68, %v67
    %vm73 = vcmask 261120
    %v75 = vsel %vm73, %v56, 0
    %77 = vmatprep.subr.bf16.mxu0 0
    %78 = vmatpush1.bf16.msra.mxu0 0
    %79 = vmatprep.subr.bf16.mxu0 0
    %80 = vmatpush1.bf16.msra.mxu0 0
    %81 = vmatprep.subr.bf16.mxu0 0
    %82 = vmatpush1.bf16.msra.mxu0 0
    %83 = vmatprep.subr.bf16.mxu0 0
    %84 = vmatpush1.bf16.msra.mxu0 0
    %85 = vmatprep.subr.bf16.mxu0 0
    %86 = vmatpush1.bf16.msra.mxu0 0
    %87 = vmatprep.subr.bf16.mxu0 0
    %88 = vmatpush1.bf16.msra.mxu0 0
    %89 = vmatprep.subr.bf16.mxu0 0
    %90 = vmatpush1.bf16.msra.mxu0 %v70
    %91 = vmatprep.subr.bf16.mxu0 0
    %92 = vmatpush1.bf16.msra.mxu0 %v69
    %93 = vmatprep.subr.bf16.mxu0 0
    %94 = vmatpush2.bf16.msra.mxu0 0
    %95 = vmatprep.subr.bf16.mxu0 0
    %96 = vmatpush2.bf16.msra.mxu0 0
    %97 = vmatprep.subr.bf16.mxu0 0
    %98 = vmatpush2.bf16.msra.mxu0 0
    %99 = vmatprep.subr.bf16.mxu0 0
    %100 = vmatpush2.bf16.msra.mxu0 0
    %101 = vmatprep.subr.bf16.mxu0 0
    %102 = vmatpush2.bf16.msra.mxu0 0
    %103 = vmatprep.subr.bf16.mxu0 0
    %104 = vmatpush2.bf16.msra.mxu0 0
    %105 = vmatprep.subr.bf16.mxu0 0
    %106 = vmatpush2.bf16.msra.mxu0 0
    %107 = vmatprep.subr.bf16.mxu0 0
    %108 = vmatpush2.bf16.msra.mxu0 0
    %109 = vmatprep.mubr.bf16.mxu0 0
    %110 = vmatmul.mubr.bf16.gmra.mxu0 %v75
    %v111 = vpop.f32.mrf.mxu0
    %v112 = vadd.f32 0.0, %v111
    %v113 = vpop.f32.mrf.mxu0
    %v114 = vpop.f32.mrf.mxu0
    %v115 = vpop.f32.mrf.mxu0
    %116 = vdwg.mxu0
    %v117 = vmax.f32 %v112, 0.0
    %v118 = vpack.c.bf16 %v117, %v117
    %v119 = vld [vmem:[#allocation7] sm:$0xf]
    %v120 = vld [vmem:[#allocation7 + $0x4] sm:$0xf]
    %v121 = vld [vmem:[#allocation7 + $0x8] sm:$0xf]
    %v122 = vld [vmem:[#allocation7 + $0xc] sm:$0xf]
    %v123 = vld [vmem:[#allocation7 + $0x10] sm:$0xf]
    %v124 = vld [vmem:[#allocation7 + $0x14] sm:$0xf]
    %v125 = vld [vmem:[#allocation7 + $0x18] sm:$0xf]
    %v126 = vld [vmem:[#allocation7 + $0x1c] sm:$0xf]
    %v127 = vld [vmem:[#allocation7 + $0x20] sm:$0xf]
    %v128 = vld [vmem:[#allocation7 + $0x24] sm:$0xf]
    %v129 = vld [vmem:[#allocation7 + $0x28] sm:$0xf]
    %v130 = vld [vmem:[#allocation7 + $0x2c] sm:$0xf]
    %v131 = vld [vmem:[#allocation7 + $0x30] sm:$0xf]
    %v132 = vld [vmem:[#allocation7 + $0x34] sm:$0xf]
    %v133 = vld [vmem:[#allocation7 + $0x38] sm:$0xf]
    %v134 = vld [vmem:[#allocation7 + $0x3c] sm:$0xf]
    %v151 = vunpack.c.l.b16 %v119
    %v152 = vunpack.c.l.b16 %v120
    %v153 = vunpack.c.l.b16 %v121
    %v154 = vunpack.c.l.b16 %v122
    %v155 = vunpack.c.l.b16 %v123
    %v156 = vunpack.c.l.b16 %v124
    %v157 = vunpack.c.l.b16 %v125
    %v158 = vunpack.c.l.b16 %v126
    %v159 = vunpack.c.l.b16 %v127
    %v160 = vunpack.c.l.b16 %v128
    %v161 = vunpack.c.l.b16 %v129
    %v162 = vunpack.c.l.b16 %v130
    %v163 = vunpack.c.l.b16 %v131
    %v164 = vunpack.c.l.b16 %v132
    %v165 = vunpack.c.l.b16 %v133
    %v166 = vunpack.c.l.b16 %v134
    %v167 = vpack.c.b16 %v152, %v151
    %v168 = vpack.c.b16 %v154, %v153
    %v169 = vpack.c.b16 %v156, %v155
    %v170 = vpack.c.b16 %v158, %v157
    %v171 = vpack.c.b16 %v160, %v159
    %v172 = vpack.c.b16 %v162, %v161
    %v173 = vpack.c.b16 %v164, %v163
    %v174 = vpack.c.b16 %v166, %v165
    %183 = vmatprep.subr.bf16.mxu0 0
    %184 = vmatpush1.bf16.msra.mxu0 %v174
    %185 = vmatprep.subr.bf16.mxu0 0
    %186 = vmatpush1.bf16.msra.mxu0 %v173
    %187 = vmatprep.subr.bf16.mxu0 0
    %188 = vmatpush1.bf16.msra.mxu0 %v172
    %189 = vmatprep.subr.bf16.mxu0 0
    %190 = vmatpush1.bf16.msra.mxu0 %v171
    %191 = vmatprep.subr.bf16.mxu0 0
    %192 = vmatpush1.bf16.msra.mxu0 %v170
    %193 = vmatprep.subr.bf16.mxu0 0
    %194 = vmatpush1.bf16.msra.mxu0 %v169
    %195 = vmatprep.subr.bf16.mxu0 0
    %196 = vmatpush1.bf16.msra.mxu0 %v168
    %197 = vmatprep.subr.bf16.mxu0 0
    %198 = vmatpush1.bf16.msra.mxu0 %v167
    %199 = vmatprep.subr.bf16.mxu0 0
    %200 = vmatpush2.bf16.msra.mxu0 0
    %201 = vmatprep.subr.bf16.mxu0 0
    %202 = vmatpush2.bf16.msra.mxu0 0
    %203 = vmatprep.subr.bf16.mxu0 0
    %204 = vmatpush2.bf16.msra.mxu0 0
    %205 = vmatprep.subr.bf16.mxu0 0
    %206 = vmatpush2.bf16.msra.mxu0 0
    %207 = vmatprep.subr.bf16.mxu0 0
    %208 = vmatpush2.bf16.msra.mxu0 0
    %209 = vmatprep.subr.bf16.mxu0 0
    %210 = vmatpush2.bf16.msra.mxu0 0
    %211 = vmatprep.subr.bf16.mxu0 0
    %212 = vmatpush2.bf16.msra.mxu0 0
    %213 = vmatprep.subr.bf16.mxu0 0
    %214 = vmatpush2.bf16.msra.mxu0 0
    %215 = vmatprep.mubr.bf16.mxu0 0
    %216 = vmatmul.mubr.bf16.gmra.mxu0 %v118
    %v217 = vpop.f32.mrf.mxu0
    %v218 = vadd.f32 0.0, %v217
    %v219 = vpop.f32.mrf.mxu0
    %v220 = vpop.f32.mrf.mxu0
    %v221 = vpop.f32.mrf.mxu0
    %222 = vdwg.mxu0
    %v223 = vlaneseq
    %v224 = vand.u32 %v223, 127
    %vm225 = vcmp.lt.s32.totalorder %v224, 8
    %v226 = vsel %vm225, %v218, -1e+30
    %227 = vmax.xlane.f32.xlu0 %v226
    %v228 = vpop.xlane.xlu0 %227
    %v229 = vsub.f32 %v226, %v228
    %v230 = vmul.f32 %v229, 1.442695
    %v231 = vpow.pop %v230
    %232 = vadd.xlane.f32.xlu0 %v231
    %v233 = vpop.xlane.xlu0 %232
    %v234 = vrcp.pop %v233
    %v235 = vmul.f32 %v231, %v234
    %vm236 = vcmask 64512
    %237 = vst.msk [vmem:[#allocation8] sm:$0xff] %vm236, %v235
    // Predicated region
    $region26: #{tpu_custom_call.1} parent=1 // pred_check
      _
    $region27: #{tpu_custom_call.1} parent=1 // pred_check_branch
      %239 = sbr.rel (0) target = $region29
    $region28: #{tpu_custom_call.1} parent=1 // pred_region
      %s241 = ssub.s32 128, 128
      %242 = vsyncadd [#allocation4], %s241
      %s244 = sshll.u32 [#allocation8], 4
      %s245 = int_to_ptr.vmem [resolvable:$true] %s244
      %247 = dma.vmem_to_hbm [thread:$0]  %s245, 128, %s3, [#allocation4]
    $region29: #{tpu_custom_call.1} parent=1 // pred_fallthru
      _
    // Predicated region
    $region30: #{tpu_custom_call.1} parent=1 // pred_check
      _
    $region31: #{tpu_custom_call.1} parent=1 // pred_check_branch
      %249 = sbr.rel (0) target = $region33
    $region32: #{tpu_custom_call.1} parent=1 // pred_region
      %250 = dma.done [#allocation4], 128
    $region33: #{tpu_custom_call.1} parent=1 // pred_fallthru
      _
    %251 = vsyncpa [#allocation3], 1
    %252 = vsyncpa [#allocation6], 1
    %253 = vsyncpa [#allocation4], 1

</llo_original>
